<compile_context>
chip_gen: v6e
topology: v6e:2x2x1
jax: 0.10.0
libtpu: 0.0.40
codegen_flags: <defaults>
</compile_context>

<pallas_src>
import functools

import jax
import jax.numpy as jnp
from jax.experimental import pallas as pl
from jax.experimental.pallas import tpu as pltpu

# ----------------------- model hyper-parameters (opts) -----------------------
VOCAB_SIZE = 50          # vocab.m_size
EMBED_DIM = 32           # opts.embed_size
KERNEL_SIZES = (3, 5)    # opts.kernel_size
KERNEL_NUM = EMBED_DIM   # opts.kernel_num (Conv2d out_channels)
LABEL_NUM = 4            # label_vocab.m_size
STRIDE = 1               # opts.stride (assumed 1 -> 'same' output length)
EMBED_UNIFORM_INIT = 0.1 # opts.embed_uniform_init
BATCH = 2
SEQ_LEN = 8

K_MAX = max(KERNEL_SIZES)                  # 5
PAD = K_MAX // 2                           # 2 (covers K=3 once its taps are centered)
NUM_CH = 2                                 # static + trainable embedding channels
E2 = NUM_CH * EMBED_DIM                    # 64 : channels live on the lane axis
IN_FEA = len(KERNEL_SIZES) * KERNEL_NUM    # 64
HIDDEN = IN_FEA // 2                       # 32


# ------------------------------ Pallas kernel --------------------------------
def fused_cnn_kernel(ids_ref, emb2_ref, wk_ref, bc_ref,
                     w1_ref, b1_ref, w2_ref, b2_ref, o_ref,
                     *, B, S, s_pad, k_max, V):
    """One-hot embedding gather + fused K=3/K=5 convs + ReLU + max-pool + MLP.

    ids_ref:  (B*s_pad, 1) int32 padded token ids (-1 sentinel at pad rows) [VMEM]
    emb2_ref: (V, 2E)  static|trainable tables, lane-concatenated            [VMEM]
    wk_ref:   (k_max, 2E, 2C) per-tap fused conv weights (K=3 zero-padded)   [VMEM]
    bc_ref:   (1, 2C)  fused conv bias (K=3 channels first, then K=5)        [VMEM]
    w1/b1/w2/b2: MLP params                                                   [VMEM]
    o_ref:    (B, label_num) logits                                           [VMEM]
    """
    rows = B * s_pad
    e2 = emb2_ref.shape[-1]
    c2 = wk_ref.shape[-1]

    # ---- embedding gather: one VPU compare + one MXU matmul -----------------
    # Padding rows carry id = -1 -> all-zero one-hot row -> exact zero padding,
    # so the slab comes out already 'same'-padded (no scratch, no zero-fill).
    ids = ids_ref[...]                                               # (rows, 1)
    vocab_iota = jax.lax.broadcasted_iota(jnp.int32, (rows, V), 1)
    onehot = (vocab_iota == ids).astype(jnp.float32)                 # (rows, V)
    slab = jnp.dot(onehot, emb2_ref[...],
                   preferred_element_type=jnp.float32)               # (rows, 2E)
    # embed_dropout: identity (eval mode).
    # Row order is batch-major, sequence-minor (ids were flattened that way);
    # s_pad is a multiple of 8 so this reshape splits on sublane-tile bounds.
    slab3 = slab.reshape(B, s_pad, e2)

    # ---- both conv branches as a sum over k_max taps (single tap loop) ------
    acc = jnp.dot(slab3[:, 0:S, :].reshape(B * S, e2), wk_ref[0],
                  preferred_element_type=jnp.float32)                # (B*S, 2C)
    for k in range(1, k_max):
        xk = slab3[:, k:k + S, :].reshape(B * S, e2)
        acc = acc + jnp.dot(xk, wk_ref[k],
                            preferred_element_type=jnp.float32)

    # ---- global max-pool over the sequence; bias + ReLU hoisted after pool --
    # (valid: ReLU is monotone and the conv bias is position-independent).
    pooled = jnp.max(acc.reshape(B, S, c2), axis=1)                  # (B, 2C)
    feat = jnp.maximum(pooled + bc_ref[...], 0.0)
    # fc_dropout: identity (eval mode)

    # ---- MLP: linear1 -> ReLU -> linear2 ------------------------------------
    h = jnp.maximum(
        jnp.dot(feat, w1_ref[...], preferred_element_type=jnp.float32)
        + b1_ref[...], 0.0)
    o_ref[...] = (jnp.dot(h, w2_ref[...], preferred_element_type=jnp.float32)
                  + b2_ref[...])


# ------------------------------- forward pass --------------------------------
def multi_channel_cnn_forward(ids, params):
    B, S = ids.shape
    # Sublane-aligned padded sequence length: >= S + 2*PAD, multiple of 8 so
    # all in-kernel reshapes split/merge on (8,128) tile boundaries.
    s_pad = ((S + 2 * PAD + 7) // 8) * 8
    ids_pad = jnp.full((B, s_pad), -1, jnp.int32)
    ids_pad = ids_pad.at[:, PAD:PAD + S].set(ids.astype(jnp.int32))
    ids_pad = ids_pad.reshape(B * s_pad, 1)

    kernel = functools.partial(fused_cnn_kernel, B=B, S=S, s_pad=s_pad,
                               k_max=K_MAX, V=VOCAB_SIZE)
    vmem = pl.BlockSpec(memory_space=pltpu.MemorySpace.VMEM)
    # Grid-less on purpose: at B*S = 16 the whole problem is a handful of vregs.
    # A batch-row grid (v7x dual TensorCore) and bf16 conv-matmul inputs only
    # pay off once batch/sequence grow by orders of magnitude.
    return pl.pallas_call(
        kernel,
        out_shape=jax.ShapeDtypeStruct((B, LABEL_NUM), jnp.float32),
        in_specs=[vmem] * 8,
        out_specs=vmem,
    )(ids_pad, params["emb2"], params["wk"], params["bc"],
      params["w1"], params["b1"], params["w2"], params["b2"])


# ------------------------------ parameter init -------------------------------
def init_params(key):
    ks = jax.random.split(key, 2 + 2 * len(KERNEL_SIZES) + 4)
    it = iter(ks)

    def uni(k, shape, a):
        return jax.random.uniform(k, shape, jnp.float32, minval=-a, maxval=a)

    # Embedding tables, lane-concatenated: cols [0:E] = static (channel 0),
    # cols [E:2E] = trainable (channel 1) — matches torch.stack order.
    emb_static = uni(next(it), (VOCAB_SIZE, EMBED_DIM), EMBED_UNIFORM_INIT)
    emb = uni(next(it), (VOCAB_SIZE, EMBED_DIM), EMBED_UNIFORM_INIT)
    emb2 = jnp.concatenate([emb_static, emb], axis=-1)        # (V, 2E)

    # Per-K conv params (torch-default bounds), repacked to per-tap blocks
    # (K, 2E, C) with rows ordered (ch, e) to match the slab lane layout, then
    # centered / zero-padded to K_MAX taps and stacked along the channel axis.
    w_blocks, b_blocks = [], []
    for K in KERNEL_SIZES:
        fan_in = NUM_CH * K * EMBED_DIM
        bound = 1.0 / (fan_in ** 0.5)
        w = uni(next(it), (NUM_CH, K, EMBED_DIM, KERNEL_NUM), bound)
        b = uni(next(it), (1, KERNEL_NUM), bound)
        w = jnp.transpose(w, (1, 0, 2, 3)).reshape(K, E2, KERNEL_NUM)
        pad_lo = (K_MAX - K) // 2
        pad_hi = K_MAX - K - pad_lo
        w_blocks.append(jnp.pad(w, ((pad_lo, pad_hi), (0, 0), (0, 0))))
        b_blocks.append(b)
    wk = jnp.concatenate(w_blocks, axis=-1)   # (K_MAX, 2E, 2C), K=3 cols first
    bc = jnp.concatenate(b_blocks, axis=-1)   # (1, 2C)

    w1_bound = 1.0 / (IN_FEA ** 0.5)
    w2_bound = 1.0 / (HIDDEN ** 0.5)
    return {
        "emb2": emb2,
        "wk": wk,
        "bc": bc,
        "w1": uni(next(it), (IN_FEA, HIDDEN), w1_bound),
        "b1": uni(next(it), (1, HIDDEN), w1_bound),
        "w2": uni(next(it), (HIDDEN, LABEL_NUM), w2_bound),
        "b2": uni(next(it), (1, LABEL_NUM), w2_bound),
    }


# ----------------------------------- main ------------------------------------
if __name__ == "__main__":
    key = jax.random.PRNGKey(0)
    k_ids, k_params = jax.random.split(key)

    ids = jax.random.randint(k_ids, (BATCH, SEQ_LEN), 0, VOCAB_SIZE, dtype=jnp.int32)
    params = init_params(k_params)

    fwd = jax.jit(multi_channel_cnn_forward)
    logits = fwd(ids, params)
    jax.block_until_ready(logits)

    assert logits.shape == (BATCH, LABEL_NUM)
    assert logits.dtype == jnp.float32
    print("KERNEL_OK")
</pallas_src>

<mosaic_0001>
module attributes {stable_mosaic.version = 11 : i64} {
  func.func @fused_cnn_kernel(%arg0: memref<32x1xi32, #tpu.memory_space<vmem>>, %arg1: memref<50x64xf32, #tpu.memory_space<vmem>>, %arg2: memref<5x64x64xf32, #tpu.memory_space<vmem>>, %arg3: memref<1x64xf32, #tpu.memory_space<vmem>>, %arg4: memref<64x32xf32, #tpu.memory_space<vmem>>, %arg5: memref<1x32xf32, #tpu.memory_space<vmem>>, %arg6: memref<32x4xf32, #tpu.memory_space<vmem>>, %arg7: memref<1x4xf32, #tpu.memory_space<vmem>>, %arg8: memref<2x4xf32, #tpu.memory_space<vmem>>) attributes {dimension_semantics = [], scalar_prefetch = 0 : i64, scratch_operands = 0 : i64, tpu.core_type = #tpu.core_type<tc>} {
    %c0 = arith.constant 0 : index
    %c0_0 = arith.constant 0 : index
    %0 = vector.load %arg0[%c0, %c0_0] : memref<32x1xi32, #tpu.memory_space<vmem>>, vector<32x1xi32>
    %1 = tpu.iota {dimensions = array<i32: 1>} : vector<32x50xi32>
    %2 = vector.broadcast %0 : vector<32x1xi32> to vector<32x50xi32>
    %3 = arith.cmpi eq, %1, %2 : vector<32x50xi32>
    %4 = arith.extui %3 : vector<32x50xi1> to vector<32x50xi32>
    %5 = arith.sitofp %4 : vector<32x50xi32> to vector<32x50xf32>
    %c0_1 = arith.constant 0 : index
    %c0_2 = arith.constant 0 : index
    %6 = vector.load %arg1[%c0_1, %c0_2] : memref<50x64xf32, #tpu.memory_space<vmem>>, vector<50x64xf32>
    %cst = arith.constant dense<0.000000e+00> : vector<32x64xf32>
    %7 = tpu.matmul %5, %6, %cst {dimension_numbers = #tpu.dot_dimension_numbers<[1], [0], [0], [1], [0, 0, 1, 1], [], []>} : vector<32x50xf32>, vector<50x64xf32>, vector<32x64xf32> -> vector<32x64xf32>
    %8 = vector.shape_cast %7 : vector<32x64xf32> to vector<2x16x64xf32>
    %9 = vector.extract_strided_slice %8 {offsets = [0, 0, 0], sizes = [2, 8, 64], strides = [1, 1, 1]} : vector<2x16x64xf32> to vector<2x8x64xf32>
    %10 = vector.shape_cast %9 : vector<2x8x64xf32> to vector<16x64xf32>
    %c0_3 = arith.constant 0 : index
    %c0_4 = arith.constant 0 : index
    %c0_5 = arith.constant 0 : index
    %11 = vector.load %arg2[%c0_3, %c0_4, %c0_5] : memref<5x64x64xf32, #tpu.memory_space<vmem>>, vector<1x64x64xf32>
    %12 = vector.shape_cast %11 : vector<1x64x64xf32> to vector<64x64xf32>
    %cst_6 = arith.constant dense<0.000000e+00> : vector<16x64xf32>
    %13 = tpu.matmul %10, %12, %cst_6 {dimension_numbers = #tpu.dot_dimension_numbers<[1], [0], [0], [1], [0, 0, 1, 1], [], []>} : vector<16x64xf32>, vector<64x64xf32>, vector<16x64xf32> -> vector<16x64xf32>
    %14 = vector.extract_strided_slice %8 {offsets = [0, 1, 0], sizes = [2, 8, 64], strides = [1, 1, 1]} : vector<2x16x64xf32> to vector<2x8x64xf32>
    %15 = vector.shape_cast %14 : vector<2x8x64xf32> to vector<16x64xf32>
    %c1 = arith.constant 1 : index
    %c0_7 = arith.constant 0 : index
    %c0_8 = arith.constant 0 : index
    %16 = vector.load %arg2[%c1, %c0_7, %c0_8] : memref<5x64x64xf32, #tpu.memory_space<vmem>>, vector<1x64x64xf32>
    %17 = vector.shape_cast %16 : vector<1x64x64xf32> to vector<64x64xf32>
    %cst_9 = arith.constant dense<0.000000e+00> : vector<16x64xf32>
    %18 = tpu.matmul %15, %17, %cst_9 {dimension_numbers = #tpu.dot_dimension_numbers<[1], [0], [0], [1], [0, 0, 1, 1], [], []>} : vector<16x64xf32>, vector<64x64xf32>, vector<16x64xf32> -> vector<16x64xf32>
    %19 = arith.addf %13, %18 : vector<16x64xf32>
    %20 = vector.extract_strided_slice %8 {offsets = [0, 2, 0], sizes = [2, 8, 64], strides = [1, 1, 1]} : vector<2x16x64xf32> to vector<2x8x64xf32>
    %21 = vector.shape_cast %20 : vector<2x8x64xf32> to vector<16x64xf32>
    %c2 = arith.constant 2 : index
    %c0_10 = arith.constant 0 : index
    %c0_11 = arith.constant 0 : index
    %22 = vector.load %arg2[%c2, %c0_10, %c0_11] : memref<5x64x64xf32, #tpu.memory_space<vmem>>, vector<1x64x64xf32>
    %23 = vector.shape_cast %22 : vector<1x64x64xf32> to vector<64x64xf32>
    %cst_12 = arith.constant dense<0.000000e+00> : vector<16x64xf32>
    %24 = tpu.matmul %21, %23, %cst_12 {dimension_numbers = #tpu.dot_dimension_numbers<[1], [0], [0], [1], [0, 0, 1, 1], [], []>} : vector<16x64xf32>, vector<64x64xf32>, vector<16x64xf32> -> vector<16x64xf32>
    %25 = arith.addf %19, %24 : vector<16x64xf32>
    %26 = vector.extract_strided_slice %8 {offsets = [0, 3, 0], sizes = [2, 8, 64], strides = [1, 1, 1]} : vector<2x16x64xf32> to vector<2x8x64xf32>
    %27 = vector.shape_cast %26 : vector<2x8x64xf32> to vector<16x64xf32>
    %c3 = arith.constant 3 : index
    %c0_13 = arith.constant 0 : index
    %c0_14 = arith.constant 0 : index
    %28 = vector.load %arg2[%c3, %c0_13, %c0_14] : memref<5x64x64xf32, #tpu.memory_space<vmem>>, vector<1x64x64xf32>
    %29 = vector.shape_cast %28 : vector<1x64x64xf32> to vector<64x64xf32>
    %cst_15 = arith.constant dense<0.000000e+00> : vector<16x64xf32>
    %30 = tpu.matmul %27, %29, %cst_15 {dimension_numbers = #tpu.dot_dimension_numbers<[1], [0], [0], [1], [0, 0, 1, 1], [], []>} : vector<16x64xf32>, vector<64x64xf32>, vector<16x64xf32> -> vector<16x64xf32>
    %31 = arith.addf %25, %30 : vector<16x64xf32>
    %32 = vector.extract_strided_slice %8 {offsets = [0, 4, 0], sizes = [2, 8, 64], strides = [1, 1, 1]} : vector<2x16x64xf32> to vector<2x8x64xf32>
    %33 = vector.shape_cast %32 : vector<2x8x64xf32> to vector<16x64xf32>
    %c4 = arith.constant 4 : index
    %c0_16 = arith.constant 0 : index
    %c0_17 = arith.constant 0 : index
    %34 = vector.load %arg2[%c4, %c0_16, %c0_17] : memref<5x64x64xf32, #tpu.memory_space<vmem>>, vector<1x64x64xf32>
    %35 = vector.shape_cast %34 : vector<1x64x64xf32> to vector<64x64xf32>
    %cst_18 = arith.constant dense<0.000000e+00> : vector<16x64xf32>
    %36 = tpu.matmul %33, %35, %cst_18 {dimension_numbers = #tpu.dot_dimension_numbers<[1], [0], [0], [1], [0, 0, 1, 1], [], []>} : vector<16x64xf32>, vector<64x64xf32>, vector<16x64xf32> -> vector<16x64xf32>
    %37 = arith.addf %31, %36 : vector<16x64xf32>
    %38 = vector.shape_cast %37 : vector<16x64xf32> to vector<2x8x64xf32>
    %cst_19 = arith.constant dense<0xFF800000> : vector<2x64xf32>
    %39 = vector.multi_reduction <maximumf>, %38, %cst_19 [1] : vector<2x8x64xf32> to vector<2x64xf32>
    %c0_20 = arith.constant 0 : index
    %c0_21 = arith.constant 0 : index
    %40 = vector.load %arg3[%c0_20, %c0_21] : memref<1x64xf32, #tpu.memory_space<vmem>>, vector<1x64xf32>
    %41 = vector.broadcast %40 : vector<1x64xf32> to vector<2x64xf32>
    %42 = arith.addf %39, %41 : vector<2x64xf32>
    %cst_22 = arith.constant 0.000000e+00 : f32
    %43 = vector.broadcast %cst_22 : f32 to vector<2x64xf32>
    %44 = arith.maximumf %42, %43 : vector<2x64xf32>
    %c0_23 = arith.constant 0 : index
    %c0_24 = arith.constant 0 : index
    %45 = vector.load %arg4[%c0_23, %c0_24] : memref<64x32xf32, #tpu.memory_space<vmem>>, vector<64x32xf32>
    %cst_25 = arith.constant dense<0.000000e+00> : vector<2x32xf32>
    %46 = tpu.matmul %44, %45, %cst_25 {dimension_numbers = #tpu.dot_dimension_numbers<[1], [0], [0], [1], [0, 0, 1, 1], [], []>} : vector<2x64xf32>, vector<64x32xf32>, vector<2x32xf32> -> vector<2x32xf32>
    %c0_26 = arith.constant 0 : index
    %c0_27 = arith.constant 0 : index
    %47 = vector.load %arg5[%c0_26, %c0_27] : memref<1x32xf32, #tpu.memory_space<vmem>>, vector<1x32xf32>
    %48 = vector.broadcast %47 : vector<1x32xf32> to vector<2x32xf32>
    %49 = arith.addf %46, %48 : vector<2x32xf32>
    %cst_28 = arith.constant 0.000000e+00 : f32
    %50 = vector.broadcast %cst_28 : f32 to vector<2x32xf32>
    %51 = arith.maximumf %49, %50 : vector<2x32xf32>
    %c0_29 = arith.constant 0 : index
    %c0_30 = arith.constant 0 : index
    %52 = vector.load %arg6[%c0_29, %c0_30] : memref<32x4xf32, #tpu.memory_space<vmem>>, vector<32x4xf32>
    %cst_31 = arith.constant dense<0.000000e+00> : vector<2x4xf32>
    %53 = tpu.matmul %51, %52, %cst_31 {dimension_numbers = #tpu.dot_dimension_numbers<[1], [0], [0], [1], [0, 0, 1, 1], [], []>} : vector<2x32xf32>, vector<32x4xf32>, vector<2x4xf32> -> vector<2x4xf32>
    %c0_32 = arith.constant 0 : index
    %c0_33 = arith.constant 0 : index
    %54 = vector.load %arg7[%c0_32, %c0_33] : memref<1x4xf32, #tpu.memory_space<vmem>>, vector<1x4xf32>
    %55 = vector.broadcast %54 : vector<1x4xf32> to vector<2x4xf32>
    %56 = arith.addf %53, %55 : vector<2x4xf32>
    %c0_34 = arith.constant 0 : index
    %c0_35 = arith.constant 0 : index
    %57 = vector.load %arg8[%c0_34, %c0_35] : memref<2x4xf32, #tpu.memory_space<vmem>>, vector<2x4xf32>
    tpu.vector_store %arg8[%c0_34, %c0_35], %56 {strides = array<i32>} : memref<2x4xf32, #tpu.memory_space<vmem>>, vector<2x4xf32>,
    return
  }
}

</mosaic_0001>

<llo_original>
// kernel: multi_channel_cnn_forward.1
$region0: #{multi_channel_cnn_forward.1}
  #allocation0 [shape = 'u32[]', space=smem, size = 0x4, offset = 0x4, fixed_abs, tag = 'smem constant byte address 0x4 - core index']
  #allocation1 [shape = 'u32[144,128]{1,0:T(1,128)}', space=vmem, size = 0x12000, scoped, tag = 'internal scratch']
  %s0 = inlined_call_operand.vmem [shape: s32[32,1], index: 0, kind: input, shape index: {}]
  %s1 = inlined_call_operand.vmem [shape: f32[50,64], index: 1, kind: input, shape index: {}]
  %s2 = inlined_call_operand.hbm [shape: f32[5,64,64], index: 2, kind: input, shape index: {}]
  %s3 = inlined_call_operand.vmem [shape: f32[1,64], index: 3, kind: input, shape index: {}]
  %s4 = inlined_call_operand.vmem [shape: f32[64,32], index: 4, kind: input, shape index: {}]
  %s5 = inlined_call_operand.vmem [shape: f32[1,32], index: 5, kind: input, shape index: {}]
  %s6 = inlined_call_operand.vmem [shape: f32[32,4], index: 6, kind: input, shape index: {}]
  %s7 = inlined_call_operand.vmem [shape: f32[1,4], index: 7, kind: input, shape index: {}]
  %s8 = inlined_call_operand.hbm [shape: f32[2,4], index: 8, kind: output, shape index: {}]
  %s9 = sld [smem:[#allocation0]]
  $region46: #{multi_channel_cnn_forward.1} parent=0
    _
  %s11 = ssub.s32 1, %s9
  %s12 = scalar_select 0, %s11, %s9
  $region1: #{multi_channel_cnn_forward.1} parent=0
    #allocation2 [shape = 'u8[163840]{0}', space=vmem, size = 0x28000, scoped, tag = 'input window, operand 2, single buffered']
    #allocation3 [shape = 's32[1]{0}', space=sflag, size = 0x4, scoped, tag = 'scoped memory for multi_channel_cnn_forward.1']
    #allocation4 [shape = 's32[1]{0}', space=sflag, size = 0x4, scoped, tag = 'scoped memory for multi_channel_cnn_forward.1']
    #allocation5 [shape = 'u8[1024]{0}', space=vmem, size = 0x400, scoped, tag = 'output window, operand 0, single buffered']
    %13 = vsyncpa [#allocation3], 0
    %14 = vsyncpa [#allocation4], 0
    // Predicated region
    $region2: #{multi_channel_cnn_forward.1} parent=1 // pred_check
      _
    $region3: #{multi_channel_cnn_forward.1} parent=1 // pred_check_branch
      %16 = sbr.rel (0) target = $region5
    $region4: #{multi_channel_cnn_forward.1} parent=1 // pred_region
      _
    $region5: #{multi_channel_cnn_forward.1} parent=1 // pred_fallthru
      _
    // Predicated region
    $region6: #{multi_channel_cnn_forward.1} parent=1 // pred_check
      _
    $region7: #{multi_channel_cnn_forward.1} parent=1 // pred_check_branch
      %18 = sbr.rel (0) target = $region9
    $region8: #{multi_channel_cnn_forward.1} parent=1 // pred_region
      _
    $region9: #{multi_channel_cnn_forward.1} parent=1 // pred_fallthru
      _
    // Predicated region
    $region10: #{multi_channel_cnn_forward.1} parent=1 // pred_check
      _
    $region11: #{multi_channel_cnn_forward.1} parent=1 // pred_check_branch
      %20 = sbr.rel (0) target = $region13
    $region12: #{multi_channel_cnn_forward.1} parent=1 // pred_region
      %s22 = ssub.s32 5120, 5120
      %23 = vsyncadd [#allocation3], %s22
      %s24 = sshll.u32 [#allocation2], 4
      %s25 = int_to_ptr.vmem [resolvable:$true] %s24
      %30 = dma.hbm_to_vmem [thread:$0]  %s2, 5120, %s25, [#allocation3], 128, 128, 8
    $region13: #{multi_channel_cnn_forward.1} parent=1 // pred_fallthru
      _
    // Predicated region
    $region14: #{multi_channel_cnn_forward.1} parent=1 // pred_check
      _
    $region15: #{multi_channel_cnn_forward.1} parent=1 // pred_check_branch
      %32 = sbr.rel (0) target = $region17
    $region16: #{multi_channel_cnn_forward.1} parent=1 // pred_region
      _
    $region17: #{multi_channel_cnn_forward.1} parent=1 // pred_fallthru
      _
    // Predicated region
    $region18: #{multi_channel_cnn_forward.1} parent=1 // pred_check
      _
    $region19: #{multi_channel_cnn_forward.1} parent=1 // pred_check_branch
      %34 = sbr.rel (0) target = $region21
    $region20: #{multi_channel_cnn_forward.1} parent=1 // pred_region
      _
    $region21: #{multi_channel_cnn_forward.1} parent=1 // pred_fallthru
      _
    // Predicated region
    $region22: #{multi_channel_cnn_forward.1} parent=1 // pred_check
      _
    $region23: #{multi_channel_cnn_forward.1} parent=1 // pred_check_branch
      %36 = sbr.rel (0) target = $region25
    $region24: #{multi_channel_cnn_forward.1} parent=1 // pred_region
      _
    $region25: #{multi_channel_cnn_forward.1} parent=1 // pred_fallthru
      _
    // Predicated region
    $region26: #{multi_channel_cnn_forward.1} parent=1 // pred_check
      _
    $region27: #{multi_channel_cnn_forward.1} parent=1 // pred_check_branch
      %38 = sbr.rel (0) target = $region29
    $region28: #{multi_channel_cnn_forward.1} parent=1 // pred_region
      _
    $region29: #{multi_channel_cnn_forward.1} parent=1 // pred_fallthru
      _
    // Predicated region
    $region30: #{multi_channel_cnn_forward.1} parent=1 // pred_check
      _
    $region31: #{multi_channel_cnn_forward.1} parent=1 // pred_check_branch
      %40 = sbr.rel (0) target = $region33
    $region32: #{multi_channel_cnn_forward.1} parent=1 // pred_region
      _
    $region33: #{multi_channel_cnn_forward.1} parent=1 // pred_fallthru
      _
    // Predicated region
    $region34: #{multi_channel_cnn_forward.1} parent=1 // pred_check
      _
    $region35: #{multi_channel_cnn_forward.1} parent=1 // pred_check_branch
      %42 = sbr.rel (0) target = $region37
    $region36: #{multi_channel_cnn_forward.1} parent=1 // pred_region
      %43 = dma.done [#allocation3], 5120
    $region37: #{multi_channel_cnn_forward.1} parent=1 // pred_fallthru
      _
    %v44 = vld [vmem:[%s0] sm:$0xff]
    %v45 = vld [vmem:[%s0 + $0x8] sm:$0xff]
    %v46 = vld [vmem:[%s0 + $0x10] sm:$0xff]
    %v47 = vld [vmem:[%s0 + $0x18] sm:$0xff]
    %v48 = vlaneseq
    %v49 = vand.u32 %v48, 127
    %50 = vset.pattern.permute.xlu0 0
    %51 = vperm.xlu0 %50, %v44
    %v52 = vpop.permute.xlu0 %51
    %53 = vset.pattern.permute.xlu0 0
    %54 = vperm.xlu0 %53, %v45
    %v55 = vpop.permute.xlu0 %54
    %56 = vset.pattern.permute.xlu0 0
    %57 = vperm.xlu0 %56, %v46
    %v58 = vpop.permute.xlu0 %57
    %59 = vset.pattern.permute.xlu0 0
    %60 = vperm.xlu0 %59, %v47
    %v61 = vpop.permute.xlu0 %60
    %vm62 = vcmp.eq.s32.totalorder %v49, %v52
    %vm63 = vcmp.eq.s32.totalorder %v49, %v55
    %vm64 = vcmp.eq.s32.totalorder %v49, %v58
    %vm65 = vcmp.eq.s32.totalorder %v49, %v61
    %v66 = vsel %vm62, 1, 0
    %v67 = vsel %vm63, 1, 0
    %v68 = vsel %vm64, 1, 0
    %v69 = vsel %vm65, 1, 0
    %v70 = vcvt.s32.f32 %v66
    %v71 = vcvt.s32.f32 %v67
    %v72 = vcvt.s32.f32 %v68
    %v73 = vcvt.s32.f32 %v69
    %v74 = vld [vmem:[%s1] sm:$0xff]
    %v75 = vld [vmem:[%s1 + $0x8] sm:$0xff]
    %v76 = vld [vmem:[%s1 + $0x10] sm:$0xff]
    %v77 = vld [vmem:[%s1 + $0x18] sm:$0xff]
    %v78 = vld [vmem:[%s1 + $0x20] sm:$0xff]
    %v79 = vld [vmem:[%s1 + $0x28] sm:$0xff]
    %v80 = vld [vmem:[%s1 + $0x30] sm:$0x3]
    %vm81 = vcmask 408576
    %v83 = vsel %vm81, %v70, 0
    %v86 = vsel %vm81, %v71, 0
    %v89 = vsel %vm81, %v72, 0
    %v92 = vsel %vm81, %v73, 0
    %vm94 = vcmask 1041408
    %v96 = vsel %vm94, %v80, 0
    %98 = vmatprep.subr.mxu0 0.0
    %99 = vmatpush1.msra.mxu0 0.0
    %100 = vmatprep.subr.mxu0 0.0
    %101 = vmatpush1.msra.mxu0 0.0
    %102 = vmatprep.subr.mxu0 0.0
    %103 = vmatpush1.msra.mxu0 0.0
    %104 = vmatprep.subr.mxu0 0.0
    %105 = vmatpush1.msra.mxu0 0.0
    %106 = vmatprep.subr.mxu0 0.0
    %107 = vmatpush1.msra.mxu0 0.0
    %108 = vmatprep.subr.mxu0 0.0
    %109 = vmatpush1.msra.mxu0 0.0
    %110 = vmatprep.subr.mxu0 0.0
    %111 = vmatpush1.msra.mxu0 0.0
    %112 = vmatprep.subr.mxu0 0.0
    %113 = vmatpush1.msra.mxu0 0.0
    %114 = vmatprep.subr.mxu0 0.0
    %115 = vmatpush1.msra.mxu0 0.0
    %116 = vmatprep.subr.mxu0 0.0
    %117 = vmatpush1.msra.mxu0 %v96
    %118 = vmatprep.subr.mxu0 0.0
    %119 = vmatpush1.msra.mxu0 %v79
    %120 = vmatprep.subr.mxu0 0.0
    %121 = vmatpush1.msra.mxu0 %v78
    %122 = vmatprep.subr.mxu0 0.0
    %123 = vmatpush1.msra.mxu0 %v77
    %124 = vmatprep.subr.mxu0 0.0
    %125 = vmatpush1.msra.mxu0 %v76
    %126 = vmatprep.subr.mxu0 0.0
    %127 = vmatpush1.msra.mxu0 %v75
    %128 = vmatprep.subr.mxu0 0.0
    %129 = vmatpush1.msra.mxu0 %v74
    %130 = vmatprep.subr.mxu0 0.0
    %131 = vmatpush2.msra.mxu0 0.0
    %132 = vmatprep.subr.mxu0 0.0
    %133 = vmatpush2.msra.mxu0 0.0
    %134 = vmatprep.subr.mxu0 0.0
    %135 = vmatpush2.msra.mxu0 0.0
    %136 = vmatprep.subr.mxu0 0.0
    %137 = vmatpush2.msra.mxu0 0.0
    %138 = vmatprep.subr.mxu0 0.0
    %139 = vmatpush2.msra.mxu0 0.0
    %140 = vmatprep.subr.mxu0 0.0
    %141 = vmatpush2.msra.mxu0 0.0
    %142 = vmatprep.subr.mxu0 0.0
    %143 = vmatpush2.msra.mxu0 0.0
    %144 = vmatprep.subr.mxu0 0.0
    %145 = vmatpush2.msra.mxu0 0.0
    %146 = vmatprep.subr.mxu0 0.0
    %147 = vmatpush2.msra.mxu0 0.0
    %148 = vmatprep.subr.mxu0 0.0
    %149 = vmatpush2.msra.mxu0 0.0
    %150 = vmatprep.subr.mxu0 0.0
    %151 = vmatpush2.msra.mxu0 0.0
    %152 = vmatprep.subr.mxu0 0.0
    %153 = vmatpush2.msra.mxu0 0.0
    %154 = vmatprep.subr.mxu0 0.0
    %155 = vmatpush2.msra.mxu0 0.0
    %156 = vmatprep.subr.mxu0 0.0
    %157 = vmatpush2.msra.mxu0 0.0
    %158 = vmatprep.subr.mxu0 0.0
    %159 = vmatpush2.msra.mxu0 0.0
    %160 = vmatprep.subr.mxu0 0.0
    %161 = vmatpush2.msra.mxu0 0.0
    %162 = vmatprep.mubr.f32.mxu0 0.0
    %163 = vmatmul.mubr.f32.gmra.mxu0 %v83
    %v164 = vpop.f32.mrf.mxu0
    %v165 = vadd.f32 0.0, %v164
    %v166 = vpop.f32.mrf.mxu0
    %167 = vmatprep.mubr.f32.mxu0 0.0
    %168 = vmatmul.mubr.f32.gmra.mxu0 %v86
    %v169 = vpop.f32.mrf.mxu0
    %v170 = vadd.f32 0.0, %v169
    %v171 = vpop.f32.mrf.mxu0
    %172 = vmatprep.mubr.f32.mxu0 0.0
    %173 = vmatmul.mubr.f32.gmra.mxu0 %v89
    %v174 = vpop.f32.mrf.mxu0
    %v175 = vadd.f32 0.0, %v174
    %v176 = vpop.f32.mrf.mxu0
    %177 = vmatprep.mubr.f32.mxu0 0.0
    %178 = vmatmul.mubr.f32.gmra.mxu0 %v92
    %v179 = vpop.f32.mrf.mxu0
    %v180 = vadd.f32 0.0, %v179
    %v181 = vpop.f32.mrf.mxu0
    %182 = vdwg.mxu0
    %v183 = vld [vmem:[#allocation2] sm:$0xff]
    %v184 = vld [vmem:[#allocation2 + $0x8] sm:$0xff]
    %v185 = vld [vmem:[#allocation2 + $0x10] sm:$0xff]
    %v186 = vld [vmem:[#allocation2 + $0x18] sm:$0xff]
    %v187 = vld [vmem:[#allocation2 + $0x20] sm:$0xff]
    %v188 = vld [vmem:[#allocation2 + $0x28] sm:$0xff]
    %v189 = vld [vmem:[#allocation2 + $0x30] sm:$0xff]
    %v190 = vld [vmem:[#allocation2 + $0x38] sm:$0xff]
    %vm195 = vcmask 1046528
    %v196 = vrot.slane %v165, 1
    %v197 = vrot.slane %v170, 1
    %v198 = vsel %vm195, %v196, %v197
    %v199 = vrot.slane %v175, 1
    %v200 = vrot.slane %v180, 1
    %v201 = vsel %vm195, %v199, %v200
    %s202 = scalar_lea.vmem [#allocation2], 64
    %v203 = vld [vmem:[%s202] sm:$0xff]
    %v204 = vld [vmem:[%s202 + $0x8] sm:$0xff]
    %v205 = vld [vmem:[%s202 + $0x10] sm:$0xff]
    %v206 = vld [vmem:[%s202 + $0x18] sm:$0xff]
    %v207 = vld [vmem:[%s202 + $0x20] sm:$0xff]
    %v208 = vld [vmem:[%s202 + $0x28] sm:$0xff]
    %v209 = vld [vmem:[%s202 + $0x30] sm:$0xff]
    %v210 = vld [vmem:[%s202 + $0x38] sm:$0xff]
    %vm211 = vcmask 523264
    %v212 = vsel %vm211, %v198, 0
    %v214 = vsel %vm211, %v201, 0
    %216 = vmatprep.subr.mxu0 0.0
    %217 = vmatpush1.msra.mxu0 0.0
    %218 = vmatprep.subr.mxu0 0.0
    %219 = vmatpush1.msra.mxu0 0.0
    %220 = vmatprep.subr.mxu0 0.0
    %221 = vmatpush1.msra.mxu0 0.0
    %222 = vmatprep.subr.mxu0 0.0
    %223 = vmatpush1.msra.mxu0 0.0
    %224 = vmatprep.subr.mxu0 0.0
    %225 = vmatpush1.msra.mxu0 0.0
    %226 = vmatprep.subr.mxu0 0.0
    %227 = vmatpush1.msra.mxu0 0.0
    %228 = vmatprep.subr.mxu0 0.0
    %229 = vmatpush1.msra.mxu0 0.0
    %230 = vmatprep.subr.mxu0 0.0
    %231 = vmatpush1.msra.mxu0 0.0
    %232 = vmatprep.subr.mxu0 0.0
    %233 = vmatpush1.msra.mxu0 %v210
    %234 = vmatprep.subr.mxu0 0.0
    %235 = vmatpush1.msra.mxu0 %v209
    %236 = vmatprep.subr.mxu0 0.0
    %237 = vmatpush1.msra.mxu0 %v208
    %238 = vmatprep.subr.mxu0 0.0
    %239 = vmatpush1.msra.mxu0 %v207
    %240 = vmatprep.subr.mxu0 0.0
    %241 = vmatpush1.msra.mxu0 %v206
    %242 = vmatprep.subr.mxu0 0.0
    %243 = vmatpush1.msra.mxu0 %v205
    %244 = vmatprep.subr.mxu0 0.0
    %245 = vmatpush1.msra.mxu0 %v204
    %246 = vmatprep.subr.mxu0 0.0
    %247 = vmatpush1.msra.mxu0 %v203
    %248 = vmatprep.subr.mxu0 0.0
    %249 = vmatpush2.msra.mxu0 0.0
    %250 = vmatprep.subr.mxu0 0.0
    %251 = vmatpush2.msra.mxu0 0.0
    %252 = vmatprep.subr.mxu0 0.0
    %253 = vmatpush2.msra.mxu0 0.0
    %254 = vmatprep.subr.mxu0 0.0
    %255 = vmatpush2.msra.mxu0 0.0
    %256 = vmatprep.subr.mxu0 0.0
    %257 = vmatpush2.msra.mxu0 0.0
    %258 = vmatprep.subr.mxu0 0.0
    %259 = vmatpush2.msra.mxu0 0.0
    %260 = vmatprep.subr.mxu0 0.0
    %261 = vmatpush2.msra.mxu0 0.0
    %262 = vmatprep.subr.mxu0 0.0
    %263 = vmatpush2.msra.mxu0 0.0
    %264 = vmatprep.subr.mxu0 0.0
    %265 = vmatpush2.msra.mxu0 0.0
    %266 = vmatprep.subr.mxu0 0.0
    %267 = vmatpush2.msra.mxu0 0.0
    %268 = vmatprep.subr.mxu0 0.0
    %269 = vmatpush2.msra.mxu0 0.0
    %270 = vmatprep.subr.mxu0 0.0
    %271 = vmatpush2.msra.mxu0 0.0
    %272 = vmatprep.subr.mxu0 0.0
    %273 = vmatpush2.msra.mxu0 0.0
    %274 = vmatprep.subr.mxu0 0.0
    %275 = vmatpush2.msra.mxu0 0.0
    %276 = vmatprep.subr.mxu0 0.0
    %277 = vmatpush2.msra.mxu0 0.0
    %278 = vmatprep.subr.mxu0 0.0
    %279 = vmatpush2.msra.mxu0 0.0
    %280 = vmatprep.mubr.f32.mxu0 0.0
    %281 = vmatmul.mubr.f32.gmra.mxu0 %v212
    %v282 = vpop.f32.mrf.mxu0
    %v283 = vadd.f32 0.0, %v282
    %v284 = vpop.f32.mrf.mxu0
    %285 = vmatprep.mubr.f32.mxu0 0.0
    %286 = vmatmul.mubr.f32.gmra.mxu0 %v214
    %v287 = vpop.f32.mrf.mxu0
    %v288 = vadd.f32 0.0, %v287
    %v289 = vpop.f32.mrf.mxu0
    %290 = vdwg.mxu0
    %v291 = vsel %vm211, %v165, 0
    %v293 = vsel %vm211, %v175, 0
    %295 = vmatprep.subr.mxu0 0.0
    %296 = vmatpush1.msra.mxu0 0.0
    %297 = vmatprep.subr.mxu0 0.0
    %298 = vmatpush1.msra.mxu0 0.0
    %299 = vmatprep.subr.mxu0 0.0
    %300 = vmatpush1.msra.mxu0 0.0
    %301 = vmatprep.subr.mxu0 0.0
    %302 = vmatpush1.msra.mxu0 0.0
    %303 = vmatprep.subr.mxu0 0.0
    %304 = vmatpush1.msra.mxu0 0.0
    %305 = vmatprep.subr.mxu0 0.0
    %306 = vmatpush1.msra.mxu0 0.0
    %307 = vmatprep.subr.mxu0 0.0
    %308 = vmatpush1.msra.mxu0 0.0
    %309 = vmatprep.subr.mxu0 0.0
    %310 = vmatpush1.msra.mxu0 0.0
    %311 = vmatprep.subr.mxu0 0.0
    %312 = vmatpush1.msra.mxu0 %v190
    %313 = vmatprep.subr.mxu0 0.0
    %314 = vmatpush1.msra.mxu0 %v189
    %315 = vmatprep.subr.mxu0 0.0
    %316 = vmatpush1.msra.mxu0 %v188
    %317 = vmatprep.subr.mxu0 0.0
    %318 = vmatpush1.msra.mxu0 %v187
    %319 = vmatprep.subr.mxu0 0.0
    %320 = vmatpush1.msra.mxu0 %v186
    %321 = vmatprep.subr.mxu0 0.0
    %322 = vmatpush1.msra.mxu0 %v185
    %323 = vmatprep.subr.mxu0 0.0
    %324 = vmatpush1.msra.mxu0 %v184
    %325 = vmatprep.subr.mxu0 0.0
    %326 = vmatpush1.msra.mxu0 %v183
    %327 = vmatprep.subr.mxu0 0.0
    %328 = vmatpush2.msra.mxu0 0.0
    %329 = vmatprep.subr.mxu0 0.0
    %330 = vmatpush2.msra.mxu0 0.0
    %331 = vmatprep.subr.mxu0 0.0
    %332 = vmatpush2.msra.mxu0 0.0
    %333 = vmatprep.subr.mxu0 0.0
    %334 = vmatpush2.msra.mxu0 0.0
    %335 = vmatprep.subr.mxu0 0.0
    %336 = vmatpush2.msra.mxu0 0.0
    %337 = vmatprep.subr.mxu0 0.0
    %338 = vmatpush2.msra.mxu0 0.0
    %339 = vmatprep.subr.mxu0 0.0
    %340 = vmatpush2.msra.mxu0 0.0
    %341 = vmatprep.subr.mxu0 0.0
    %342 = vmatpush2.msra.mxu0 0.0
    %343 = vmatprep.subr.mxu0 0.0
    %344 = vmatpush2.msra.mxu0 0.0
    %345 = vmatprep.subr.mxu0 0.0
    %346 = vmatpush2.msra.mxu0 0.0
    %347 = vmatprep.subr.mxu0 0.0
    %348 = vmatpush2.msra.mxu0 0.0
    %349 = vmatprep.subr.mxu0 0.0
    %350 = vmatpush2.msra.mxu0 0.0
    %351 = vmatprep.subr.mxu0 0.0
    %352 = vmatpush2.msra.mxu0 0.0
    %353 = vmatprep.subr.mxu0 0.0
    %354 = vmatpush2.msra.mxu0 0.0
    %355 = vmatprep.subr.mxu0 0.0
    %356 = vmatpush2.msra.mxu0 0.0
    %357 = vmatprep.subr.mxu0 0.0
    %358 = vmatpush2.msra.mxu0 0.0
    %359 = vmatprep.mubr.f32.mxu0 0.0
    %360 = vmatmul.mubr.f32.gmra.mxu0 %v291
    %v361 = vpop.f32.mrf.mxu0
    %v362 = vadd.f32 %v283, %v361
    %v363 = vpop.f32.mrf.mxu0
    %364 = vmatprep.mubr.f32.mxu0 0.0
    %365 = vmatmul.mubr.f32.gmra.mxu0 %v293
    %v366 = vpop.f32.mrf.mxu0
    %v367 = vadd.f32 %v288, %v366
    %v368 = vpop.f32.mrf.mxu0
    %369 = vdwg.mxu0
    %vm370 = vcmask 1045504
    %v371 = vrot.slane %v165, 2
    %v372 = vrot.slane %v170, 2
    %v373 = vsel %vm370, %v371, %v372
    %v374 = vrot.slane %v175, 2
    %v375 = vrot.slane %v180, 2
    %v376 = vsel %vm370, %v374, %v375
    %s377 = scalar_lea.vmem [#allocation2], 128
    %v378 = vld [vmem:[%s377] sm:$0xff]
    %v379 = vld [vmem:[%s377 + $0x8] sm:$0xff]
    %v380 = vld [vmem:[%s377 + $0x10] sm:$0xff]
    %v381 = vld [vmem:[%s377 + $0x18] sm:$0xff]
    %v382 = vld [vmem:[%s377 + $0x20] sm:$0xff]
    %v383 = vld [vmem:[%s377 + $0x28] sm:$0xff]
    %v384 = vld [vmem:[%s377 + $0x30] sm:$0xff]
    %v385 = vld [vmem:[%s377 + $0x38] sm:$0xff]
    %v386 = vsel %vm211, %v373, 0
    %v388 = vsel %vm211, %v376, 0
    %390 = vmatprep.subr.mxu0 0.0
    %391 = vmatpush1.msra.mxu0 0.0
    %392 = vmatprep.subr.mxu0 0.0
    %393 = vmatpush1.msra.mxu0 0.0
    %394 = vmatprep.subr.mxu0 0.0
    %395 = vmatpush1.msra.mxu0 0.0
    %396 = vmatprep.subr.mxu0 0.0
    %397 = vmatpush1.msra.mxu0 0.0
    %398 = vmatprep.subr.mxu0 0.0
    %399 = vmatpush1.msra.mxu0 0.0
    %400 = vmatprep.subr.mxu0 0.0
    %401 = vmatpush1.msra.mxu0 0.0
    %402 = vmatprep.subr.mxu0 0.0
    %403 = vmatpush1.msra.mxu0 0.0
    %404 = vmatprep.subr.mxu0 0.0
    %405 = vmatpush1.msra.mxu0 0.0
    %406 = vmatprep.subr.mxu0 0.0
    %407 = vmatpush1.msra.mxu0 %v385
    %408 = vmatprep.subr.mxu0 0.0
    %409 = vmatpush1.msra.mxu0 %v384
    %410 = vmatprep.subr.mxu0 0.0
    %411 = vmatpush1.msra.mxu0 %v383
    %412 = vmatprep.subr.mxu0 0.0
    %413 = vmatpush1.msra.mxu0 %v382
    %414 = vmatprep.subr.mxu0 0.0
    %415 = vmatpush1.msra.mxu0 %v381
    %416 = vmatprep.subr.mxu0 0.0
    %417 = vmatpush1.msra.mxu0 %v380
    %418 = vmatprep.subr.mxu0 0.0
    %419 = vmatpush1.msra.mxu0 %v379
    %420 = vmatprep.subr.mxu0 0.0
    %421 = vmatpush1.msra.mxu0 %v378
    %422 = vmatprep.subr.mxu0 0.0
    %423 = vmatpush2.msra.mxu0 0.0
    %424 = vmatprep.subr.mxu0 0.0
    %425 = vmatpush2.msra.mxu0 0.0
    %426 = vmatprep.subr.mxu0 0.0
    %427 = vmatpush2.msra.mxu0 0.0
    %428 = vmatprep.subr.mxu0 0.0
    %429 = vmatpush2.msra.mxu0 0.0
    %430 = vmatprep.subr.mxu0 0.0
    %431 = vmatpush2.msra.mxu0 0.0
    %432 = vmatprep.subr.mxu0 0.0
    %433 = vmatpush2.msra.mxu0 0.0
    %434 = vmatprep.subr.mxu0 0.0
    %435 = vmatpush2.msra.mxu0 0.0
    %436 = vmatprep.subr.mxu0 0.0
    %437 = vmatpush2.msra.mxu0 0.0
    %438 = vmatprep.subr.mxu0 0.0
    %439 = vmatpush2.msra.mxu0 0.0
    %440 = vmatprep.subr.mxu0 0.0
    %441 = vmatpush2.msra.mxu0 0.0
    %442 = vmatprep.subr.mxu0 0.0
    %443 = vmatpush2.msra.mxu0 0.0
    %444 = vmatprep.subr.mxu0 0.0
    %445 = vmatpush2.msra.mxu0 0.0
    %446 = vmatprep.subr.mxu0 0.0
    %447 = vmatpush2.msra.mxu0 0.0
    %448 = vmatprep.subr.mxu0 0.0
    %449 = vmatpush2.msra.mxu0 0.0
    %450 = vmatprep.subr.mxu0 0.0
    %451 = vmatpush2.msra.mxu0 0.0
    %452 = vmatprep.subr.mxu0 0.0
    %453 = vmatpush2.msra.mxu0 0.0
    %454 = vmatprep.mubr.f32.mxu0 0.0
    %455 = vmatmul.mubr.f32.gmra.mxu0 %v386
    %v456 = vpop.f32.mrf.mxu0
    %v457 = vadd.f32 0.0, %v456
    %v458 = vpop.f32.mrf.mxu0
    %459 = vmatprep.mubr.f32.mxu0 0.0
    %460 = vmatmul.mubr.f32.gmra.mxu0 %v388
    %v461 = vpop.f32.mrf.mxu0
    %v462 = vadd.f32 0.0, %v461
    %v463 = vpop.f32.mrf.mxu0
    %464 = vdwg.mxu0
    %v465 = vadd.f32 %v362, %v457
    %v466 = vadd.f32 %v367, %v462
    %vm467 = vcmask 1044480
    %v468 = vrot.slane %v165, 3
    %v469 = vrot.slane %v170, 3
    %v470 = vsel %vm467, %v468, %v469
    %v471 = vrot.slane %v175, 3
    %v472 = vrot.slane %v180, 3
    %v473 = vsel %vm467, %v471, %v472
    %s474 = scalar_lea.vmem [#allocation2], 192
    %v475 = vld [vmem:[%s474] sm:$0xff]
    %v476 = vld [vmem:[%s474 + $0x8] sm:$0xff]
    %v477 = vld [vmem:[%s474 + $0x10] sm:$0xff]
    %v478 = vld [vmem:[%s474 + $0x18] sm:$0xff]
    %v479 = vld [vmem:[%s474 + $0x20] sm:$0xff]
    %v480 = vld [vmem:[%s474 + $0x28] sm:$0xff]
    %v481 = vld [vmem:[%s474 + $0x30] sm:$0xff]
    %v482 = vld [vmem:[%s474 + $0x38] sm:$0xff]
    %v483 = vsel %vm211, %v470, 0
    %v485 = vsel %vm211, %v473, 0
    %487 = vmatprep.subr.mxu0 0.0
    %488 = vmatpush1.msra.mxu0 0.0
    %489 = vmatprep.subr.mxu0 0.0
    %490 = vmatpush1.msra.mxu0 0.0
    %491 = vmatprep.subr.mxu0 0.0
    %492 = vmatpush1.msra.mxu0 0.0
    %493 = vmatprep.subr.mxu0 0.0
    %494 = vmatpush1.msra.mxu0 0.0
    %495 = vmatprep.subr.mxu0 0.0
    %496 = vmatpush1.msra.mxu0 0.0
    %497 = vmatprep.subr.mxu0 0.0
    %498 = vmatpush1.msra.mxu0 0.0
    %499 = vmatprep.subr.mxu0 0.0
    %500 = vmatpush1.msra.mxu0 0.0
    %501 = vmatprep.subr.mxu0 0.0
    %502 = vmatpush1.msra.mxu0 0.0
    %503 = vmatprep.subr.mxu0 0.0
    %504 = vmatpush1.msra.mxu0 %v482
    %505 = vmatprep.subr.mxu0 0.0
    %506 = vmatpush1.msra.mxu0 %v481
    %507 = vmatprep.subr.mxu0 0.0
    %508 = vmatpush1.msra.mxu0 %v480
    %509 = vmatprep.subr.mxu0 0.0
    %510 = vmatpush1.msra.mxu0 %v479
    %511 = vmatprep.subr.mxu0 0.0
    %512 = vmatpush1.msra.mxu0 %v478
    %513 = vmatprep.subr.mxu0 0.0
    %514 = vmatpush1.msra.mxu0 %v477
    %515 = vmatprep.subr.mxu0 0.0
    %516 = vmatpush1.msra.mxu0 %v476
    %517 = vmatprep.subr.mxu0 0.0
    %518 = vmatpush1.msra.mxu0 %v475
    %519 = vmatprep.subr.mxu0 0.0
    %520 = vmatpush2.msra.mxu0 0.0
    %521 = vmatprep.subr.mxu0 0.0
    %522 = vmatpush2.msra.mxu0 0.0
    %523 = vmatprep.subr.mxu0 0.0
    %524 = vmatpush2.msra.mxu0 0.0
    %525 = vmatprep.subr.mxu0 0.0
    %526 = vmatpush2.msra.mxu0 0.0
    %527 = vmatprep.subr.mxu0 0.0
    %528 = vmatpush2.msra.mxu0 0.0
    %529 = vmatprep.subr.mxu0 0.0
    %530 = vmatpush2.msra.mxu0 0.0
    %531 = vmatprep.subr.mxu0 0.0
    %532 = vmatpush2.msra.mxu0 0.0
    %533 = vmatprep.subr.mxu0 0.0
    %534 = vmatpush2.msra.mxu0 0.0
    %535 = vmatprep.subr.mxu0 0.0
    %536 = vmatpush2.msra.mxu0 0.0
    %537 = vmatprep.subr.mxu0 0.0
    %538 = vmatpush2.msra.mxu0 0.0
    %539 = vmatprep.subr.mxu0 0.0
    %540 = vmatpush2.msra.mxu0 0.0
    %541 = vmatprep.subr.mxu0 0.0
    %542 = vmatpush2.msra.mxu0 0.0
    %543 = vmatprep.subr.mxu0 0.0
    %544 = vmatpush2.msra.mxu0 0.0
    %545 = vmatprep.subr.mxu0 0.0
    %546 = vmatpush2.msra.mxu0 0.0
    %547 = vmatprep.subr.mxu0 0.0
    %548 = vmatpush2.msra.mxu0 0.0
    %549 = vmatprep.subr.mxu0 0.0
    %550 = vmatpush2.msra.mxu0 0.0
    %551 = vmatprep.mubr.f32.mxu0 0.0
    %552 = vmatmul.mubr.f32.gmra.mxu0 %v483
    %v553 = vpop.f32.mrf.mxu0
    %v554 = vadd.f32 0.0, %v553
    %v555 = vpop.f32.mrf.mxu0
    %556 = vmatprep.mubr.f32.mxu0 0.0
    %557 = vmatmul.mubr.f32.gmra.mxu0 %v485
    %v558 = vpop.f32.mrf.mxu0
    %v559 = vadd.f32 0.0, %v558
    %v560 = vpop.f32.mrf.mxu0
    %561 = vdwg.mxu0
    %v562 = vadd.f32 %v465, %v554
    %v563 = vadd.f32 %v466, %v559
    %vm564 = vcmask 1043456
    %v565 = vrot.slane %v165, 4
    %v566 = vrot.slane %v170, 4
    %v567 = vsel %vm564, %v565, %v566
    %v568 = vrot.slane %v175, 4
    %v569 = vrot.slane %v180, 4
    %v570 = vsel %vm564, %v568, %v569
    %s571 = scalar_lea.vmem [#allocation2], 256
    %v572 = vld [vmem:[%s571] sm:$0xff]
    %v573 = vld [vmem:[%s571 + $0x8] sm:$0xff]
    %v574 = vld [vmem:[%s571 + $0x10] sm:$0xff]
    %v575 = vld [vmem:[%s571 + $0x18] sm:$0xff]
    %v576 = vld [vmem:[%s571 + $0x20] sm:$0xff]
    %v577 = vld [vmem:[%s571 + $0x28] sm:$0xff]
    %v578 = vld [vmem:[%s571 + $0x30] sm:$0xff]
    %v579 = vld [vmem:[%s571 + $0x38] sm:$0xff]
    %v580 = vsel %vm211, %v567, 0
    %v582 = vsel %vm211, %v570, 0
    %584 = vmatprep.subr.mxu0 0.0
    %585 = vmatpush1.msra.mxu0 0.0
    %586 = vmatprep.subr.mxu0 0.0
    %587 = vmatpush1.msra.mxu0 0.0
    %588 = vmatprep.subr.mxu0 0.0
    %589 = vmatpush1.msra.mxu0 0.0
    %590 = vmatprep.subr.mxu0 0.0
    %591 = vmatpush1.msra.mxu0 0.0
    %592 = vmatprep.subr.mxu0 0.0
    %593 = vmatpush1.msra.mxu0 0.0
    %594 = vmatprep.subr.mxu0 0.0
    %595 = vmatpush1.msra.mxu0 0.0
    %596 = vmatprep.subr.mxu0 0.0
    %597 = vmatpush1.msra.mxu0 0.0
    %598 = vmatprep.subr.mxu0 0.0
    %599 = vmatpush1.msra.mxu0 0.0
    %600 = vmatprep.subr.mxu0 0.0
    %601 = vmatpush1.msra.mxu0 %v579
    %602 = vmatprep.subr.mxu0 0.0
    %603 = vmatpush1.msra.mxu0 %v578
    %604 = vmatprep.subr.mxu0 0.0
    %605 = vmatpush1.msra.mxu0 %v577
    %606 = vmatprep.subr.mxu0 0.0
    %607 = vmatpush1.msra.mxu0 %v576
    %608 = vmatprep.subr.mxu0 0.0
    %609 = vmatpush1.msra.mxu0 %v575
    %610 = vmatprep.subr.mxu0 0.0
    %611 = vmatpush1.msra.mxu0 %v574
    %612 = vmatprep.subr.mxu0 0.0
    %613 = vmatpush1.msra.mxu0 %v573
    %614 = vmatprep.subr.mxu0 0.0
    %615 = vmatpush1.msra.mxu0 %v572
    %616 = vmatprep.subr.mxu0 0.0
    %617 = vmatpush2.msra.mxu0 0.0
    %618 = vmatprep.subr.mxu0 0.0
    %619 = vmatpush2.msra.mxu0 0.0
    %620 = vmatprep.subr.mxu0 0.0
    %621 = vmatpush2.msra.mxu0 0.0
    %622 = vmatprep.subr.mxu0 0.0
    %623 = vmatpush2.msra.mxu0 0.0
    %624 = vmatprep.subr.mxu0 0.0
    %625 = vmatpush2.msra.mxu0 0.0
    %626 = vmatprep.subr.mxu0 0.0
    %627 = vmatpush2.msra.mxu0 0.0
    %628 = vmatprep.subr.mxu0 0.0
    %629 = vmatpush2.msra.mxu0 0.0
    %630 = vmatprep.subr.mxu0 0.0
    %631 = vmatpush2.msra.mxu0 0.0
    %632 = vmatprep.subr.mxu0 0.0
    %633 = vmatpush2.msra.mxu0 0.0
    %634 = vmatprep.subr.mxu0 0.0
    %635 = vmatpush2.msra.mxu0 0.0
    %636 = vmatprep.subr.mxu0 0.0
    %637 = vmatpush2.msra.mxu0 0.0
    %638 = vmatprep.subr.mxu0 0.0
    %639 = vmatpush2.msra.mxu0 0.0
    %640 = vmatprep.subr.mxu0 0.0
    %641 = vmatpush2.msra.mxu0 0.0
    %642 = vmatprep.subr.mxu0 0.0
    %643 = vmatpush2.msra.mxu0 0.0
    %644 = vmatprep.subr.mxu0 0.0
    %645 = vmatpush2.msra.mxu0 0.0
    %646 = vmatprep.subr.mxu0 0.0
    %647 = vmatpush2.msra.mxu0 0.0
    %648 = vmatprep.mubr.f32.mxu0 0.0
    %649 = vmatmul.mubr.f32.gmra.mxu0 %v580
    %v650 = vpop.f32.mrf.mxu0
    %v651 = vadd.f32 0.0, %v650
    %v652 = vpop.f32.mrf.mxu0
    %653 = vmatprep.mubr.f32.mxu0 0.0
    %654 = vmatmul.mubr.f32.gmra.mxu0 %v582
    %v655 = vpop.f32.mrf.mxu0
    %v656 = vadd.f32 0.0, %v655
    %v657 = vpop.f32.mrf.mxu0
    %658 = vdwg.mxu0
    %v659 = vadd.f32 %v562, %v651
    %v660 = vadd.f32 %v563, %v656
    %v661 = vsel %vm211, %v659, -inf
    %v662 = vrot.slane %v661, 4
    %v663 = vmax.f32 %v661, %v662
    %v664 = vrot.slane %v663, 2
    %v665 = vmax.f32 %v663, %v664
    %v666 = vrot.slane %v665, 1
    %v667 = vmax.f32 %v665, %v666
    %v668 = vsel %vm211, %v660, -inf
    %v669 = vrot.slane %v668, 4
    %v670 = vmax.f32 %v668, %v669
    %v671 = vrot.slane %v670, 2
    %v672 = vmax.f32 %v670, %v671
    %v673 = vrot.slane %v672, 1
    %v674 = vmax.f32 %v672, %v673
    %v675 = vld [vmem:[%s3] sm:$0x1]
    %v677 = vlaneseq
    %v678 = vshrl.u32 %v677, 7
    %v679 = vsub.s32 0, %v678
    %v680 = vrot.slane %v675, %v679
    %v682 = vadd.f32 %v667, %v680
    %v683 = vadd.f32 %v674, %v680
    %v684 = vmax.f32 %v682, 0.0
    %v685 = vmax.f32 %v683, 0.0
    %v686 = vld [vmem:[%s4] sm:$0xff]
    %v687 = vld [vmem:[%s4 + $0x8] sm:$0xff]
    %v688 = vld [vmem:[%s4 + $0x10] sm:$0xff]
    %v689 = vld [vmem:[%s4 + $0x18] sm:$0xff]
    %v690 = vld [vmem:[%s4 + $0x20] sm:$0xff]
    %v691 = vld [vmem:[%s4 + $0x28] sm:$0xff]
    %v692 = vld [vmem:[%s4 + $0x30] sm:$0xff]
    %v693 = vld [vmem:[%s4 + $0x38] sm:$0xff]
    %v694 = vld [vmem:[%s5] sm:$0x1]
    %v696 = vlaneseq
    %v697 = vshrl.u32 %v696, 7
    %v698 = vsub.s32 0, %v697
    %v699 = vrot.slane %v694, %v698
    %v703 = vrot.slane %v685, 7
    %vm704 = vcmask 1041409
    %v705 = vsel %vm704, %v703, %v684
    %v706 = vsel %vm211, %v705, 0
    %708 = vmatprep.subr.mxu0 0.0
    %709 = vmatpush1.msra.mxu0 0.0
    %710 = vmatprep.subr.mxu0 0.0
    %711 = vmatpush1.msra.mxu0 0.0
    %712 = vmatprep.subr.mxu0 0.0
    %713 = vmatpush1.msra.mxu0 0.0
    %714 = vmatprep.subr.mxu0 0.0
    %715 = vmatpush1.msra.mxu0 0.0
    %716 = vmatprep.subr.mxu0 0.0
    %717 = vmatpush1.msra.mxu0 0.0
    %718 = vmatprep.subr.mxu0 0.0
    %719 = vmatpush1.msra.mxu0 0.0
    %720 = vmatprep.subr.mxu0 0.0
    %721 = vmatpush1.msra.mxu0 0.0
    %722 = vmatprep.subr.mxu0 0.0
    %723 = vmatpush1.msra.mxu0 0.0
    %724 = vmatprep.subr.mxu0 0.0
    %725 = vmatpush1.msra.mxu0 %v693
    %726 = vmatprep.subr.mxu0 0.0
    %727 = vmatpush1.msra.mxu0 %v692
    %728 = vmatprep.subr.mxu0 0.0
    %729 = vmatpush1.msra.mxu0 %v691
    %730 = vmatprep.subr.mxu0 0.0
    %731 = vmatpush1.msra.mxu0 %v690
    %732 = vmatprep.subr.mxu0 0.0
    %733 = vmatpush1.msra.mxu0 %v689
    %734 = vmatprep.subr.mxu0 0.0
    %735 = vmatpush1.msra.mxu0 %v688
    %736 = vmatprep.subr.mxu0 0.0
    %737 = vmatpush1.msra.mxu0 %v687
    %738 = vmatprep.subr.mxu0 0.0
    %739 = vmatpush1.msra.mxu0 %v686
    %740 = vmatprep.subr.mxu0 0.0
    %741 = vmatpush2.msra.mxu0 0.0
    %742 = vmatprep.subr.mxu0 0.0
    %743 = vmatpush2.msra.mxu0 0.0
    %744 = vmatprep.subr.mxu0 0.0
    %745 = vmatpush2.msra.mxu0 0.0
    %746 = vmatprep.subr.mxu0 0.0
    %747 = vmatpush2.msra.mxu0 0.0
    %748 = vmatprep.subr.mxu0 0.0
    %749 = vmatpush2.msra.mxu0 0.0
    %750 = vmatprep.subr.mxu0 0.0
    %751 = vmatpush2.msra.mxu0 0.0
    %752 = vmatprep.subr.mxu0 0.0
    %753 = vmatpush2.msra.mxu0 0.0
    %754 = vmatprep.subr.mxu0 0.0
    %755 = vmatpush2.msra.mxu0 0.0
    %756 = vmatprep.subr.mxu0 0.0
    %757 = vmatpush2.msra.mxu0 0.0
    %758 = vmatprep.subr.mxu0 0.0
    %759 = vmatpush2.msra.mxu0 0.0
    %760 = vmatprep.subr.mxu0 0.0
    %761 = vmatpush2.msra.mxu0 0.0
    %762 = vmatprep.subr.mxu0 0.0
    %763 = vmatpush2.msra.mxu0 0.0
    %764 = vmatprep.subr.mxu0 0.0
    %765 = vmatpush2.msra.mxu0 0.0
    %766 = vmatprep.subr.mxu0 0.0
    %767 = vmatpush2.msra.mxu0 0.0
    %768 = vmatprep.subr.mxu0 0.0
    %769 = vmatpush2.msra.mxu0 0.0
    %770 = vmatprep.subr.mxu0 0.0
    %771 = vmatpush2.msra.mxu0 0.0
    %772 = vmatprep.mubr.f32.mxu0 0.0
    %773 = vmatmul.mubr.f32.gmra.mxu0 %v706
    %v774 = vpop.f32.mrf.mxu0
    %v775 = vadd.f32 %v699, %v774
    %v776 = vpop.f32.mrf.mxu0
    %777 = vdwg.mxu0
    %v778 = vmax.f32 %v775, 0.0
    %v779 = vld [vmem:[%s6] sm:$0xff]
    %v780 = vld [vmem:[%s6 + $0x8] sm:$0xff]
    %v781 = vld [vmem:[%s6 + $0x10] sm:$0xff]
    %v782 = vld [vmem:[%s6 + $0x18] sm:$0xff]
    %v783 = vld [vmem:[%s7] sm:$0x1]
    %v785 = vlaneseq
    %v786 = vshrl.u32 %v785, 7
    %v787 = vsub.s32 0, %v786
    %v788 = vrot.slane %v783, %v787
    %vm790 = vcmask 261120
    %v792 = vsel %vm790, %v778, 0
    %794 = vmatprep.subr.mxu0 0.0
    %795 = vmatpush1.msra.mxu0 0.0
    %796 = vmatprep.subr.mxu0 0.0
    %797 = vmatpush1.msra.mxu0 0.0
    %798 = vmatprep.subr.mxu0 0.0
    %799 = vmatpush1.msra.mxu0 0.0
    %800 = vmatprep.subr.mxu0 0.0
    %801 = vmatpush1.msra.mxu0 0.0
    %802 = vmatprep.subr.mxu0 0.0
    %803 = vmatpush1.msra.mxu0 0.0
    %804 = vmatprep.subr.mxu0 0.0
    %805 = vmatpush1.msra.mxu0 0.0
    %806 = vmatprep.subr.mxu0 0.0
    %807 = vmatpush1.msra.mxu0 0.0
    %808 = vmatprep.subr.mxu0 0.0
    %809 = vmatpush1.msra.mxu0 0.0
    %810 = vmatprep.subr.mxu0 0.0
    %811 = vmatpush1.msra.mxu0 0.0
    %812 = vmatprep.subr.mxu0 0.0
    %813 = vmatpush1.msra.mxu0 0.0
    %814 = vmatprep.subr.mxu0 0.0
    %815 = vmatpush1.msra.mxu0 0.0
    %816 = vmatprep.subr.mxu0 0.0
    %817 = vmatpush1.msra.mxu0 0.0
    %818 = vmatprep.subr.mxu0 0.0
    %819 = vmatpush1.msra.mxu0 %v782
    %820 = vmatprep.subr.mxu0 0.0
    %821 = vmatpush1.msra.mxu0 %v781
    %822 = vmatprep.subr.mxu0 0.0
    %823 = vmatpush1.msra.mxu0 %v780
    %824 = vmatprep.subr.mxu0 0.0
    %825 = vmatpush1.msra.mxu0 %v779
    %826 = vmatprep.subr.mxu0 0.0
    %827 = vmatpush2.msra.mxu0 0.0
    %828 = vmatprep.subr.mxu0 0.0
    %829 = vmatpush2.msra.mxu0 0.0
    %830 = vmatprep.subr.mxu0 0.0
    %831 = vmatpush2.msra.mxu0 0.0
    %832 = vmatprep.subr.mxu0 0.0
    %833 = vmatpush2.msra.mxu0 0.0
    %834 = vmatprep.subr.mxu0 0.0
    %835 = vmatpush2.msra.mxu0 0.0
    %836 = vmatprep.subr.mxu0 0.0
    %837 = vmatpush2.msra.mxu0 0.0
    %838 = vmatprep.subr.mxu0 0.0
    %839 = vmatpush2.msra.mxu0 0.0
    %840 = vmatprep.subr.mxu0 0.0
    %841 = vmatpush2.msra.mxu0 0.0
    %842 = vmatprep.subr.mxu0 0.0
    %843 = vmatpush2.msra.mxu0 0.0
    %844 = vmatprep.subr.mxu0 0.0
    %845 = vmatpush2.msra.mxu0 0.0
    %846 = vmatprep.subr.mxu0 0.0
    %847 = vmatpush2.msra.mxu0 0.0
    %848 = vmatprep.subr.mxu0 0.0
    %849 = vmatpush2.msra.mxu0 0.0
    %850 = vmatprep.subr.mxu0 0.0
    %851 = vmatpush2.msra.mxu0 0.0
    %852 = vmatprep.subr.mxu0 0.0
    %853 = vmatpush2.msra.mxu0 0.0
    %854 = vmatprep.subr.mxu0 0.0
    %855 = vmatpush2.msra.mxu0 0.0
    %856 = vmatprep.subr.mxu0 0.0
    %857 = vmatpush2.msra.mxu0 0.0
    %858 = vmatprep.mubr.f32.mxu0 0.0
    %859 = vmatmul.mubr.f32.gmra.mxu0 %v792
    %v860 = vpop.f32.mrf.mxu0
    %v861 = vadd.f32 %v788, %v860
    %v862 = vpop.f32.mrf.mxu0
    %863 = vdwg.mxu0
    %vm864 = vcmask 25600
    %865 = vst.msk [vmem:[#allocation5] sm:$0x3] %vm864, %v861
    // Predicated region
    $region38: #{multi_channel_cnn_forward.1} parent=1 // pred_check
      _
    $region39: #{multi_channel_cnn_forward.1} parent=1 // pred_check_branch
      %867 = sbr.rel (0) target = $region41
    $region40: #{multi_channel_cnn_forward.1} parent=1 // pred_region
      %s869 = ssub.s32 32, 32
      %870 = vsyncadd [#allocation4], %s869
      %s872 = sshll.u32 [#allocation5], 4
      %s873 = int_to_ptr.vmem [resolvable:$true] %s872
      %875 = dma.vmem_to_hbm [thread:$0]  %s873, 32, %s8, [#allocation4]
    $region41: #{multi_channel_cnn_forward.1} parent=1 // pred_fallthru
      _
    // Predicated region
    $region42: #{multi_channel_cnn_forward.1} parent=1 // pred_check
      _
    $region43: #{multi_channel_cnn_forward.1} parent=1 // pred_check_branch
      %877 = sbr.rel (0) target = $region45
    $region44: #{multi_channel_cnn_forward.1} parent=1 // pred_region
      %878 = dma.done [#allocation4], 32
    $region45: #{multi_channel_cnn_forward.1} parent=1 // pred_fallthru
      _
    %879 = vsyncpa [#allocation3], 1
    %880 = vsyncpa [#allocation4], 1

</llo_original>
